<compile_context>
chip_gen: v7x
topology: tpu7x:2x2x1
jax: 0.10.0
libtpu: 0.0.40
codegen_flags: <defaults>
</compile_context>

<pallas_src>
import math
import functools

import jax
import jax.numpy as jnp
from jax.experimental import pallas as pl
from jax.experimental.pallas import tpu as pltpu


# --------------------------------------------------------------------------
# Kernel
# --------------------------------------------------------------------------
def union_rgcn_kernel(lhs_ref, rhs_ref, prevh_ref, bias_ref, out_ref, acc_ref,
                      *, num_k_blocks):
    D = prevh_ref.shape[-1]
    tk = lhs_ref.shape[-1]
    k = pl.program_id(1)

    @pl.when(k == 0)
    def _():
        acc_ref[...] = jnp.zeros_like(acc_ref)

    # Fused bf16 matmul (f32 accumulation):
    #   cols [0:D)   agg            = (norm*[A|C]) @ (S @ W_neighbor)
    #   cols [D:2D)  loop_keep      = (h*mask)       @ loop_weight
    #   cols [2D:3D) loop_evolve    = (h*(1-mask))   @ evolve_loop_weight
    #   cols [3D:4D) skip_logit(-b) = prev_h         @ skip_connect_weight
    if num_k_blocks == 1:
        rhs_blk = rhs_ref[...]                       # whole (resident) RHS
    else:
        start = pl.multiple_of(k * tk, tk)           # slice resident RHS in VMEM
        rhs_blk = rhs_ref[pl.ds(start, tk), :]
    acc_ref[...] += jnp.dot(lhs_ref[...], rhs_blk,
                            preferred_element_type=jnp.float32)

    @pl.when(k == num_k_blocks - 1)
    def _():
        f = acc_ref[...]
        agg = f[:, 0:D]
        loop_msg = f[:, D:2 * D] + f[:, 2 * D:3 * D]   # masked halves sum to where()
        gate = jax.nn.sigmoid(f[:, 3 * D:4 * D] + bias_ref[...])
        prev_h = prevh_ref[...]                        # f32 residual path
        node = gate * (agg + loop_msg) + (1.0 - gate) * prev_h
        node = jnp.maximum(node, 0.0)                  # activation=relu; dropout=0 no-op
        pad_w = out_ref.shape[-1] - D
        if pad_w:                                      # lane-dense 128-wide store
            node = jnp.concatenate(
                [node, jnp.zeros((node.shape[0], pad_w), node.dtype)], axis=1)
        out_ref[...] = node


# --------------------------------------------------------------------------
# Planning helpers (static, per-generation)
# --------------------------------------------------------------------------
def _round_up(x, m):
    return -(-x // m) * m


def _vmem_budget_bytes():
    cap = 64 * (1 << 20)                  # conservative default (v7x per-TC VMEM)
    try:
        cap = int(pltpu.get_tpu_info().vmem_capacity_bytes)
    except Exception:
        pass
    # ~96 MiB usable on v5e/v6e (128 MiB), ~40 MiB on v7x (64 MiB).
    return max(int(min(0.75 * cap, cap - 24 * (1 << 20))), 16 * (1 << 20))


def _plan_tiles(n, k_total, d, out_w):
    budget = _vmem_budget_bytes()

    def need(tm_, tk_):
        k_pad_ = _round_up(k_total, tk_)
        return (2 * tm_ * tk_ * 2            # LHS tile (bf16, double-buffered)
                + 2 * k_pad_ * 4 * d * 2     # resident fused RHS (bf16)
                + 2 * tm_ * d * 4            # prev_h tile (f32)
                + 2 * tm_ * out_w * 4        # lane-dense out tile (f32)
                + tm_ * 4 * d * 4            # f32 accumulator scratch
                + 8 * tm_ * out_w * 4        # epilogue temporaries / slack
                + (2 << 20))                 # misc / internal scratch headroom

    n_pad0 = _round_up(n, 64)
    # Big row tiles: HBM-bound LHS stream -> DMA tile size is the first-order
    # lever (29%/63%/85% of roofline at 128/256/512-row tiles).
    tm = 1024 if budget >= 80 * (1 << 20) else 512
    # ...but keep >= ~8 grid steps on big graphs so pipelining / megacore
    # sharding have work; small graphs simply run one block.
    while tm > 256 and n_pad0 > 8 * 256 and n_pad0 // tm < 8:
        tm //= 2
    tm = min(tm, n_pad0)

    # Whole (padded) K when it fits; otherwise add an accumulation grid axis.
    tk = _round_up(k_total, 128)
    while need(tm, tk) > budget and tk > 512:
        tk = _round_up(tk // 2, 128)
    while need(tm, tk) > budget and tm > 64:
        tm //= 2

    vmem_limit = int(max(min(budget, 2 * need(tm, tk)), 8 * (1 << 20)))
    return tm, tk, vmem_limit


# --------------------------------------------------------------------------
# Forward wrapper
# --------------------------------------------------------------------------
@functools.partial(jax.jit, static_argnames=("tm", "tk", "n_pad", "k_pad",
                                             "out_w", "vmem_limit"))
def _union_rgcn_call(h, prev_h, A, C, norm, deg_mask, rel_emb,
                     w_neighbor, loop_w, evolve_loop_w, skip_w, skip_b,
                     *, tm, tk, n_pad, k_pad, out_w, vmem_limit):
    N, D = h.shape
    R = rel_emb.shape[0]
    NR = N + R
    K_total = NR + 3 * D

    # ---- wrapper glue: algebraic pre-folds + layout (one-time XLA work) ----
    # norm fold:        ((norm*[A|C]) @ [h;rel]) @ W == ((A@h + C@rel) @ W)*norm
    # W_neighbor fold:  (AC_n @ S) @ W == AC_n @ (S @ W)
    SW = jnp.concatenate([h, rel_emb], axis=0) @ w_neighbor          # (NR, D) f32
    ACn = jnp.concatenate([A, C], axis=1) * norm                     # (N, NR)
    m = deg_mask.reshape(N, 1)
    lhs = jnp.concatenate([ACn, h * m, h * (1.0 - m), prev_h], axis=1)
    # Zero-pad rows/cols (padded rows stay finite: relu(gate*0+(1-gate)*0)=0).
    lhs = jnp.pad(lhs, ((0, n_pad - N), (0, k_pad - K_total))).astype(jnp.bfloat16)

    rhs = jnp.zeros((k_pad, 4 * D), jnp.float32)
    rhs = rhs.at[0:NR, 0:D].set(SW)
    rhs = rhs.at[NR:NR + D, D:2 * D].set(loop_w)
    rhs = rhs.at[NR + D:NR + 2 * D, 2 * D:3 * D].set(evolve_loop_w)
    rhs = rhs.at[NR + 2 * D:NR + 3 * D, 3 * D:4 * D].set(skip_w)
    rhs = rhs.astype(jnp.bfloat16)

    prev_pad = jnp.pad(prev_h, ((0, n_pad - N), (0, 0))).astype(jnp.float32)
    bias = skip_b.reshape(1, D).astype(jnp.float32)

    m_tiles = n_pad // tm
    k_tiles = k_pad // tk

    flops = 2 * n_pad * k_pad * 4 * D + 12 * n_pad * D
    bytes_accessed = (n_pad * k_pad * 2 + k_pad * 4 * D * 2
                      + n_pad * D * 4 + n_pad * out_w * 4 + D * 4)
    cost = pl.CostEstimate(flops=int(flops), transcendentals=int(n_pad * D),
                           bytes_accessed=int(bytes_accessed))

    kernel = functools.partial(union_rgcn_kernel, num_k_blocks=k_tiles)

    out = pl.pallas_call(
        kernel,
        out_shape=jax.ShapeDtypeStruct((n_pad, out_w), jnp.float32),
        grid=(m_tiles, k_tiles),
        in_specs=[
            pl.BlockSpec((tm, tk), lambda i, k: (i, k)),        # fused LHS stream (bf16)
            pl.BlockSpec((k_pad, 4 * D), lambda i, k: (0, 0)),  # fused RHS (resident, bf16)
            pl.BlockSpec((tm, D), lambda i, k: (i, 0)),         # prev_h (f32 residual)
            pl.BlockSpec((1, D), lambda i, k: (0, 0)),          # skip bias (resident)
        ],
        out_specs=pl.BlockSpec((tm, out_w), lambda i, k: (i, 0)),
        scratch_shapes=[pltpu.VMEM((tm, 4 * D), jnp.float32)],  # f32 accumulator
        compiler_params=pltpu.CompilerParams(
            dimension_semantics=("parallel", "arbitrary"),
            vmem_limit_bytes=vmem_limit),
        cost_estimate=cost,
    )(lhs, rhs, prev_pad, bias)

    return out[:N, :D]


def union_rgcn_forward(h, prev_h, A, C, norm, deg_mask, rel_emb,
                       w_neighbor, loop_w, evolve_loop_w, skip_w, skip_b,
                       *, tm=None, tk=None):
    N, D = h.shape
    R = rel_emb.shape[0]
    K_total = N + R + 3 * D
    out_w = _round_up(max(D, 128), 128)
    tm_auto, tk_auto, vmem_limit = _plan_tiles(N, K_total, D, out_w)
    tm = tm_auto if tm is None else tm
    tk = tk_auto if tk is None else tk
    n_pad = _round_up(N, tm)
    k_pad = _round_up(K_total, tk)
    return _union_rgcn_call(h, prev_h, A, C, norm, deg_mask, rel_emb,
                            w_neighbor, loop_w, evolve_loop_w, skip_w, skip_b,
                            tm=tm, tk=tk, n_pad=n_pad, k_pad=k_pad,
                            out_w=out_w, vmem_limit=vmem_limit)


# --------------------------------------------------------------------------
# Demo / correctness check
# --------------------------------------------------------------------------
def xavier_uniform(key, shape, gain):
    fan_in, fan_out = shape[0], shape[1]
    bound = gain * math.sqrt(6.0 / (fan_in + fan_out))
    return jax.random.uniform(key, shape, jnp.float32, -bound, bound)


if __name__ == "__main__":
    # Small synthetic graph / model config.
    N = 64          # number of nodes
    D = 32          # in_feat == out_feat (required by msg_func's .view(-1, out_feat))
    R = 8           # num_rels
    E = 128         # number of edges
    relu_gain = math.sqrt(2.0)   # nn.init.calculate_gain('relu')

    root = jax.random.PRNGKey(0)
    keys = jax.random.split(root, 10)

    # Parameters (xavier_uniform init, matching __init__).
    w_neighbor = xavier_uniform(keys[0], (D, D), relu_gain)
    loop_w = xavier_uniform(keys[1], (D, D), relu_gain)
    evolve_loop_w = xavier_uniform(keys[2], (D, D), relu_gain)
    skip_w = xavier_uniform(keys[3], (D, D), relu_gain)
    skip_b = jnp.zeros((1, D), jnp.float32)

    # Graph data: node features, prev hidden state, edges (src, dst, type).
    h = jax.random.normal(keys[4], (N, D), jnp.float32)
    prev_h = jax.random.normal(keys[5], (N, D), jnp.float32)
    src = jax.random.randint(keys[6], (E,), 0, N)
    dst = jax.random.randint(keys[7], (E,), 0, N)
    etype = jax.random.randint(keys[8], (E,), 0, R)
    rel_emb = jax.random.normal(keys[9], (R, D), jnp.float32)

    # Glue: densify the graph structure (adjacency count / relation count).
    A = jnp.zeros((N, N), jnp.float32).at[dst, src].add(1.0)       # A[v,u] = #edges u->v
    C = jnp.zeros((N, R), jnp.float32).at[dst, etype].add(1.0)     # C[v,r] = #in-edges of type r
    in_deg = A.sum(axis=1)
    deg_mask = (in_deg > 0).astype(jnp.float32).reshape(N, 1)
    norm = jnp.where(in_deg > 0, 1.0 / jnp.maximum(in_deg, 1.0), 1.0).reshape(N, 1)

    # Pure-fp32 JAX reference (original module semantics).
    agg_ref = ((A @ h + C @ rel_emb) @ w_neighbor) * norm
    loop_ref = jnp.where(deg_mask > 0, h @ loop_w, h @ evolve_loop_w)
    gate_ref = jax.nn.sigmoid(prev_h @ skip_w + skip_b)
    ref = jnp.maximum(gate_ref * (agg_ref + loop_ref) + (1 - gate_ref) * prev_h, 0.0)

    # 1) Auto-planned tiles: toy graph collapses to a single block (grid (1,1)).
    out = union_rgcn_forward(h, prev_h, A, C, norm, deg_mask, rel_emb,
                             w_neighbor, loop_w, evolve_loop_w, skip_w, skip_b)
    out = jax.block_until_ready(out)

    # 2) Forced small tiles: exercises the multi-row-tile + K-accumulation path.
    out_tiled = union_rgcn_forward(h, prev_h, A, C, norm, deg_mask, rel_emb,
                                   w_neighbor, loop_w, evolve_loop_w, skip_w, skip_b,
                                   tm=32, tk=128)
    out_tiled = jax.block_until_ready(out_tiled)

    assert out.shape == (N, D)
    assert out_tiled.shape == (N, D)
    # The O(N^2) aggregation and weight matmuls stream in bf16 (f32 MXU
    # accumulation), so allow mixed-precision tolerance vs the f32 reference.
    assert jnp.allclose(out, ref, atol=6e-2, rtol=5e-2), "auto-tiled mismatch vs reference"
    assert jnp.allclose(out_tiled, ref, atol=6e-2, rtol=5e-2), "K-tiled mismatch vs reference"

    print("KERNEL_OK")
</pallas_src>

<mosaic_0001>
module attributes {stable_mosaic.version = 11 : i64} {
  func.func @union_rgcn_kernel(%arg0: i32, %arg1: i32, %arg2: memref<64x256xbf16, #tpu.memory_space<vmem>>, %arg3: memref<256x128xbf16, #tpu.memory_space<vmem>>, %arg4: memref<64x32xf32, #tpu.memory_space<vmem>>, %arg5: memref<1x32xf32, #tpu.memory_space<vmem>>, %arg6: memref<64x128xf32, #tpu.memory_space<vmem>>, %arg7: memref<64x128xf32, #tpu.memory_space<vmem>>) attributes {dimension_semantics = [#tpu.dimension_semantics<parallel>, #tpu.dimension_semantics<arbitrary>], iteration_bounds = array<i64: 1, 1>, scalar_prefetch = 0 : i64, scratch_operands = 1 : i64, tpu.core_type = #tpu.core_type<tc>, window_params = [{transform_indices = @transform_0, window_bounds = array<i64: 64, 256>}, {pipeline_mode = #tpu.pipeline_mode<synchronous>, transform_indices = @transform_1, window_bounds = array<i64: 256, 128>}, {transform_indices = @transform_2, window_bounds = array<i64: 64, 32>}, {pipeline_mode = #tpu.pipeline_mode<synchronous>, transform_indices = @transform_3, window_bounds = array<i64: 1, 32>}, {transform_indices = @transform_4, window_bounds = array<i64: 64, 128>}]} {
    %c0_i32 = arith.constant 0 : i32
    %0 = arith.cmpi eq, %arg1, %c0_i32 : i32
    %1 = arith.extui %0 : i1 to i32
    %c0_i32_0 = arith.constant 0 : i32
    %2 = arith.cmpi ne, %1, %c0_i32_0 : i32
    scf.if %2 {
      %cst_10 = arith.constant 0.000000e+00 : f32
      %12 = vector.broadcast %cst_10 : f32 to vector<64x128xf32>
      %c0_11 = arith.constant 0 : index
      %c0_12 = arith.constant 0 : index
      %13 = vector.load %arg7[%c0_11, %c0_12] : memref<64x128xf32, #tpu.memory_space<vmem>>, vector<64x128xf32>
      tpu.vector_store %arg7[%c0_11, %c0_12], %12 {strides = array<i32>} : memref<64x128xf32, #tpu.memory_space<vmem>>, vector<64x128xf32>,
    } else {
    }
    %c0 = arith.constant 0 : index
    %c0_1 = arith.constant 0 : index
    %3 = vector.load %arg3[%c0, %c0_1] : memref<256x128xbf16, #tpu.memory_space<vmem>>, vector<256x128xbf16>
    %c0_2 = arith.constant 0 : index
    %c0_3 = arith.constant 0 : index
    %4 = vector.load %arg7[%c0_2, %c0_3] : memref<64x128xf32, #tpu.memory_space<vmem>>, vector<64x128xf32>
    %c0_4 = arith.constant 0 : index
    %c0_5 = arith.constant 0 : index
    %5 = vector.load %arg2[%c0_4, %c0_5] : memref<64x256xbf16, #tpu.memory_space<vmem>>, vector<64x256xbf16>
    %cst = arith.constant dense<0.000000e+00> : vector<64x128xf32>
    %6 = tpu.matmul %5, %3, %cst {dimension_numbers = #tpu.dot_dimension_numbers<[1], [0], [0], [1], [0, 0, 1, 1], [], []>} : vector<64x256xbf16>, vector<256x128xbf16>, vector<64x128xf32> -> vector<64x128xf32>
    %7 = arith.addf %4, %6 : vector<64x128xf32>
    %c0_6 = arith.constant 0 : index
    %c0_7 = arith.constant 0 : index
    %8 = vector.load %arg7[%c0_6, %c0_7] : memref<64x128xf32, #tpu.memory_space<vmem>>, vector<64x128xf32>
    tpu.vector_store %arg7[%c0_6, %c0_7], %7 {strides = array<i32>} : memref<64x128xf32, #tpu.memory_space<vmem>>, vector<64x128xf32>,
    %c0_i32_8 = arith.constant 0 : i32
    %9 = arith.cmpi eq, %arg1, %c0_i32_8 : i32
    %10 = arith.extui %9 : i1 to i32
    %c0_i32_9 = arith.constant 0 : i32
    %11 = arith.cmpi ne, %10, %c0_i32_9 : i32
    scf.if %11 {
      %c0_10 = arith.constant 0 : index
      %c0_11 = arith.constant 0 : index
      %12 = vector.load %arg7[%c0_10, %c0_11] : memref<64x128xf32, #tpu.memory_space<vmem>>, vector<64x128xf32>
      %13 = vector.extract_strided_slice %12 {offsets = [0, 0], sizes = [64, 32], strides = [1, 1]} : vector<64x128xf32> to vector<64x32xf32>
      %14 = vector.extract_strided_slice %12 {offsets = [0, 32], sizes = [64, 32], strides = [1, 1]} : vector<64x128xf32> to vector<64x32xf32>
      %15 = vector.extract_strided_slice %12 {offsets = [0, 64], sizes = [64, 32], strides = [1, 1]} : vector<64x128xf32> to vector<64x32xf32>
      %16 = arith.addf %14, %15 : vector<64x32xf32>
      %17 = vector.extract_strided_slice %12 {offsets = [0, 96], sizes = [64, 32], strides = [1, 1]} : vector<64x128xf32> to vector<64x32xf32>
      %c0_12 = arith.constant 0 : index
      %c0_13 = arith.constant 0 : index
      %18 = vector.load %arg5[%c0_12, %c0_13] : memref<1x32xf32, #tpu.memory_space<vmem>>, vector<1x32xf32>
      %19 = vector.broadcast %18 : vector<1x32xf32> to vector<64x32xf32>
      %20 = arith.addf %17, %19 : vector<64x32xf32>
      %21 = arith.negf %20 : vector<64x32xf32>
      %22 = math.exp %21 : vector<64x32xf32>
      %cst_14 = arith.constant 1.000000e+00 : f32
      %23 = vector.broadcast %cst_14 : f32 to vector<64x32xf32>
      %24 = arith.addf %23, %22 : vector<64x32xf32>
      %25 = arith.divf %23, %24 : vector<64x32xf32>
      %c0_15 = arith.constant 0 : index
      %c0_16 = arith.constant 0 : index
      %26 = vector.load %arg4[%c0_15, %c0_16] : memref<64x32xf32, #tpu.memory_space<vmem>>, vector<64x32xf32>
      %27 = arith.addf %13, %16 : vector<64x32xf32>
      %28 = arith.mulf %25, %27 : vector<64x32xf32>
      %cst_17 = arith.constant 1.000000e+00 : f32
      %29 = vector.broadcast %cst_17 : f32 to vector<64x32xf32>
      %30 = arith.subf %29, %25 : vector<64x32xf32>
      %31 = arith.mulf %30, %26 : vector<64x32xf32>
      %32 = arith.addf %28, %31 : vector<64x32xf32>
      %cst_18 = arith.constant 0.000000e+00 : f32
      %33 = vector.broadcast %cst_18 : f32 to vector<64x32xf32>
      %34 = arith.maximumf %32, %33 : vector<64x32xf32>
      %cst_19 = arith.constant 0.000000e+00 : f32
      %35 = vector.broadcast %cst_19 : f32 to vector<64x96xf32>
      %36 = tpu.concatenate %34, %35 in 1 : vector<64x32xf32>, vector<64x96xf32> -> vector<64x128xf32>
      %c0_20 = arith.constant 0 : index
      %c0_21 = arith.constant 0 : index
      %37 = vector.load %arg6[%c0_20, %c0_21] : memref<64x128xf32, #tpu.memory_space<vmem>>, vector<64x128xf32>
      tpu.vector_store %arg6[%c0_20, %c0_21], %36 {strides = array<i32>} : memref<64x128xf32, #tpu.memory_space<vmem>>, vector<64x128xf32>,
    } else {
    }
    return
  }
  func.func @transform_0(%arg0: i32, %arg1: i32) -> (i32, i32) {
    %c0_i32 = arith.constant 0 : i32
    return %arg0, %arg1 : i32, i32
  }
  func.func @transform_1(%arg0: i32, %arg1: i32) -> (i32, i32) {
    %c0_i32 = arith.constant 0 : i32
    %c0_i32_0 = arith.constant 0 : i32
    %c0_i32_1 = arith.constant 0 : i32
    return %c0_i32, %c0_i32_0 : i32, i32
  }
  func.func @transform_2(%arg0: i32, %arg1: i32) -> (i32, i32) {
    %c0_i32 = arith.constant 0 : i32
    %c0_i32_0 = arith.constant 0 : i32
    return %arg0, %c0_i32 : i32, i32
  }
  func.func @transform_3(%arg0: i32, %arg1: i32) -> (i32, i32) {
    %c0_i32 = arith.constant 0 : i32
    %c0_i32_0 = arith.constant 0 : i32
    %c0_i32_1 = arith.constant 0 : i32
    return %c0_i32, %c0_i32_0 : i32, i32
  }
  func.func @transform_4(%arg0: i32, %arg1: i32) -> (i32, i32) {
    %c0_i32 = arith.constant 0 : i32
    %c0_i32_0 = arith.constant 0 : i32
    return %arg0, %c0_i32 : i32, i32
  }
}

</mosaic_0001>

<llo_original>
// kernel: _union_rgcn_call.1
$region0: #{_union_rgcn_call.1}
  #allocation0 [shape = 'u32[]', space=smem, size = 0x4, offset = 0x4, fixed_abs, tag = 'smem constant byte address 0x4 - core index']
  #allocation1 [shape = 'u32[144,128]{1,0:T(1,128)}', space=vmem, size = 0x12000, scoped, tag = 'internal scratch']
  #allocation2 [shape = 'f32[64,128]{1,0:T(8,128)}', space=vmem, size = 0x8000, scoped, tag = 'scratch operand']
  %s0 = inlined_call_operand.vmem [shape: bf16[64,256], index: 0, kind: input, shape index: {}]
  %s1 = inlined_call_operand.vmem [shape: bf16[256,128], index: 1, kind: input, shape index: {}]
  %s2 = inlined_call_operand.vmem [shape: f32[64,32], index: 2, kind: input, shape index: {}]
  %s3 = inlined_call_operand.vmem [shape: f32[1,32], index: 3, kind: input, shape index: {}]
  %s4 = inlined_call_operand.vmem [shape: f32[64,128], index: 4, kind: output, shape index: {}]
  %s5 = sld [smem:[#allocation0]]
  $region34: #{_union_rgcn_call.1} parent=0
    _
  %s7 = ssub.s32 1, %s5
  %s8 = scalar_select 0, %s7, %s5
  // Predicated region
  $region2: #{_union_rgcn_call.1} parent=0 // pred_check
    _
  $region3: #{_union_rgcn_call.1} parent=0 // pred_check_branch
    %10 = sbr.rel (0) target = $region5
  $region4: #{_union_rgcn_call.1} parent=0 // pred_region
    _
  $region5: #{_union_rgcn_call.1} parent=0 // pred_fallthru
    _
  // Predicated region
  $region6: #{_union_rgcn_call.1} parent=0 // pred_check
    _
  $region7: #{_union_rgcn_call.1} parent=0 // pred_check_branch
    %12 = sbr.rel (0) target = $region9
  $region8: #{_union_rgcn_call.1} parent=0 // pred_region
    _
  $region9: #{_union_rgcn_call.1} parent=0 // pred_fallthru
    _
  // Predicated region
  $region10: #{_union_rgcn_call.1} parent=0 // pred_check
    _
  $region11: #{_union_rgcn_call.1} parent=0 // pred_check_branch
    %14 = sbr.rel (0) target = $region13
  $region12: #{_union_rgcn_call.1} parent=0 // pred_region
    _
  $region13: #{_union_rgcn_call.1} parent=0 // pred_fallthru
    _
  // Predicated region
  $region14: #{_union_rgcn_call.1} parent=0 // pred_check
    _
  $region15: #{_union_rgcn_call.1} parent=0 // pred_check_branch
    %16 = sbr.rel (0) target = $region17
  $region16: #{_union_rgcn_call.1} parent=0 // pred_region
    _
  $region17: #{_union_rgcn_call.1} parent=0 // pred_fallthru
    _
  %p18 = scmp.eq.s32.totalorder 0, 0
  // Predicated region
  $region18: #{_union_rgcn_call.1} parent=0 // pred_check
    %p19 = pneg %p18
  $region19: #{_union_rgcn_call.1} parent=0 // pred_check_branch
    %21 = sbr.rel (%p19) target = $region21
  $region20: #{_union_rgcn_call.1} parent=0 // pred_region
    %22 = vst [vmem:[#allocation2] sm:$0xff] 0.0
    %23 = vst [vmem:[#allocation2 + $0x8] sm:$0xff] 0.0
    %24 = vst [vmem:[#allocation2 + $0x10] sm:$0xff] 0.0
    %25 = vst [vmem:[#allocation2 + $0x18] sm:$0xff] 0.0
    %26 = vst [vmem:[#allocation2 + $0x20] sm:$0xff] 0.0
    %27 = vst [vmem:[#allocation2 + $0x28] sm:$0xff] 0.0
    %28 = vst [vmem:[#allocation2 + $0x30] sm:$0xff] 0.0
    %29 = vst [vmem:[#allocation2 + $0x38] sm:$0xff] 0.0
  $region21: #{_union_rgcn_call.1} parent=0 // pred_fallthru
    _
  %v30 = vld [vmem:[%s1] sm:$0xf]
  %v31 = vld [vmem:[%s1 + $0x4] sm:$0xf]
  %v32 = vld [vmem:[%s1 + $0x8] sm:$0xf]
  %v33 = vld [vmem:[%s1 + $0xc] sm:$0xf]
  %v34 = vld [vmem:[%s1 + $0x10] sm:$0xf]
  %v35 = vld [vmem:[%s1 + $0x14] sm:$0xf]
  %v36 = vld [vmem:[%s1 + $0x18] sm:$0xf]
  %v37 = vld [vmem:[%s1 + $0x1c] sm:$0xf]
  %v38 = vld [vmem:[%s1 + $0x20] sm:$0xf]
  %v39 = vld [vmem:[%s1 + $0x24] sm:$0xf]
  %v40 = vld [vmem:[%s1 + $0x28] sm:$0xf]
  %v41 = vld [vmem:[%s1 + $0x2c] sm:$0xf]
  %v42 = vld [vmem:[%s1 + $0x30] sm:$0xf]
  %v43 = vld [vmem:[%s1 + $0x34] sm:$0xf]
  %v44 = vld [vmem:[%s1 + $0x38] sm:$0xf]
  %v45 = vld [vmem:[%s1 + $0x3c] sm:$0xf]
  %v46 = vld [vmem:[%s1 + $0x40] sm:$0xf]
  %v47 = vld [vmem:[%s1 + $0x44] sm:$0xf]
  %v48 = vld [vmem:[%s1 + $0x48] sm:$0xf]
  %v49 = vld [vmem:[%s1 + $0x4c] sm:$0xf]
  %v50 = vld [vmem:[%s1 + $0x50] sm:$0xf]
  %v51 = vld [vmem:[%s1 + $0x54] sm:$0xf]
  %v52 = vld [vmem:[%s1 + $0x58] sm:$0xf]
  %v53 = vld [vmem:[%s1 + $0x5c] sm:$0xf]
  %v54 = vld [vmem:[%s1 + $0x60] sm:$0xf]
  %v55 = vld [vmem:[%s1 + $0x64] sm:$0xf]
  %v56 = vld [vmem:[%s1 + $0x68] sm:$0xf]
  %v57 = vld [vmem:[%s1 + $0x6c] sm:$0xf]
  %v58 = vld [vmem:[%s1 + $0x70] sm:$0xf]
  %v59 = vld [vmem:[%s1 + $0x74] sm:$0xf]
  %v60 = vld [vmem:[%s1 + $0x78] sm:$0xf]
  %v61 = vld [vmem:[%s1 + $0x7c] sm:$0xf]
  %v62 = vld [vmem:[#allocation2] sm:$0xff]
  %v63 = vld [vmem:[#allocation2 + $0x8] sm:$0xff]
  %v64 = vld [vmem:[#allocation2 + $0x10] sm:$0xff]
  %v65 = vld [vmem:[#allocation2 + $0x18] sm:$0xff]
  %v66 = vld [vmem:[#allocation2 + $0x20] sm:$0xff]
  %v67 = vld [vmem:[#allocation2 + $0x28] sm:$0xff]
  %v68 = vld [vmem:[#allocation2 + $0x30] sm:$0xff]
  %v69 = vld [vmem:[#allocation2 + $0x38] sm:$0xff]
  %v70 = vld [vmem:[%s0] sm:$0xff]
  %v71 = vld [vmem:[%s0 + $0x8] sm:$0xff]
  %v72 = vld [vmem:[%s0 + $0x10] sm:$0xff]
  %v73 = vld [vmem:[%s0 + $0x18] sm:$0xff]
  %v74 = vld [vmem:[%s0 + $0x20] sm:$0xff]
  %v75 = vld [vmem:[%s0 + $0x28] sm:$0xff]
  %v76 = vld [vmem:[%s0 + $0x30] sm:$0xff]
  %v77 = vld [vmem:[%s0 + $0x38] sm:$0xff]
  %v86 = vunpack.c.l.b16 %v70
  %v87 = vunpack.c.h.b16 %v70
  %v88 = vunpack.c.l.b16 %v71
  %v89 = vunpack.c.h.b16 %v71
  %v90 = vunpack.c.l.b16 %v72
  %v91 = vunpack.c.h.b16 %v72
  %v92 = vunpack.c.l.b16 %v73
  %v93 = vunpack.c.h.b16 %v73
  %v94 = vunpack.c.l.b16 %v74
  %v95 = vunpack.c.h.b16 %v74
  %v96 = vunpack.c.l.b16 %v75
  %v97 = vunpack.c.h.b16 %v75
  %v98 = vunpack.c.l.b16 %v76
  %v99 = vunpack.c.h.b16 %v76
  %v100 = vunpack.c.l.b16 %v77
  %v101 = vunpack.c.h.b16 %v77
  %v102 = vpack.c.b16 %v88, %v86
  %v103 = vpack.c.b16 %v89, %v87
  %v104 = vpack.c.b16 %v92, %v90
  %v105 = vpack.c.b16 %v93, %v91
  %v106 = vpack.c.b16 %v96, %v94
  %v107 = vpack.c.b16 %v97, %v95
  %v108 = vpack.c.b16 %v100, %v98
  %v109 = vpack.c.b16 %v101, %v99
  %v150 = vunpack.c.l.b16 %v30
  %v151 = vunpack.c.l.b16 %v31
  %v152 = vunpack.c.l.b16 %v32
  %v153 = vunpack.c.l.b16 %v33
  %v154 = vunpack.c.l.b16 %v34
  %v155 = vunpack.c.l.b16 %v35
  %v156 = vunpack.c.l.b16 %v36
  %v157 = vunpack.c.l.b16 %v37
  %v158 = vunpack.c.l.b16 %v38
  %v159 = vunpack.c.l.b16 %v39
  %v160 = vunpack.c.l.b16 %v40
  %v161 = vunpack.c.l.b16 %v41
  %v162 = vunpack.c.l.b16 %v42
  %v163 = vunpack.c.l.b16 %v43
  %v164 = vunpack.c.l.b16 %v44
  %v165 = vunpack.c.l.b16 %v45
  %v166 = vunpack.c.l.b16 %v46
  %v167 = vunpack.c.l.b16 %v47
  %v168 = vunpack.c.l.b16 %v48
  %v169 = vunpack.c.l.b16 %v49
  %v170 = vunpack.c.l.b16 %v50
  %v171 = vunpack.c.l.b16 %v51
  %v172 = vunpack.c.l.b16 %v52
  %v173 = vunpack.c.l.b16 %v53
  %v174 = vunpack.c.l.b16 %v54
  %v175 = vunpack.c.l.b16 %v55
  %v176 = vunpack.c.l.b16 %v56
  %v177 = vunpack.c.l.b16 %v57
  %v178 = vunpack.c.l.b16 %v58
  %v179 = vunpack.c.l.b16 %v59
  %v180 = vunpack.c.l.b16 %v60
  %v181 = vunpack.c.l.b16 %v61
  %v182 = vpack.c.b16 %v151, %v150
  %v183 = vpack.c.b16 %v153, %v152
  %v184 = vpack.c.b16 %v155, %v154
  %v185 = vpack.c.b16 %v157, %v156
  %v186 = vpack.c.b16 %v159, %v158
  %v187 = vpack.c.b16 %v161, %v160
  %v188 = vpack.c.b16 %v163, %v162
  %v189 = vpack.c.b16 %v165, %v164
  %v190 = vpack.c.b16 %v167, %v166
  %v191 = vpack.c.b16 %v169, %v168
  %v192 = vpack.c.b16 %v171, %v170
  %v193 = vpack.c.b16 %v173, %v172
  %v194 = vpack.c.b16 %v175, %v174
  %v195 = vpack.c.b16 %v177, %v176
  %v196 = vpack.c.b16 %v179, %v178
  %v197 = vpack.c.b16 %v181, %v180
  %214 = vmatprep.subr.bf16.mxu0 0
  %215 = vmatpush1.bf16.msra.mxu0 %v182
  %216 = vmatprep.subr.bf16.mxu0 0
  %217 = vmatpush1.bf16.msra.mxu0 %v183
  %218 = vmatprep.subr.bf16.mxu0 0
  %219 = vmatpush1.bf16.msra.mxu0 %v184
  %220 = vmatprep.subr.bf16.mxu0 0
  %221 = vmatpush1.bf16.msra.mxu0 %v185
  %222 = vmatprep.subr.bf16.mxu0 0
  %223 = vmatpush1.bf16.msra.mxu0 %v186
  %224 = vmatprep.subr.bf16.mxu0 0
  %225 = vmatpush1.bf16.msra.mxu0 %v187
  %226 = vmatprep.subr.bf16.mxu0 0
  %227 = vmatpush1.bf16.msra.mxu0 %v188
  %228 = vmatprep.subr.bf16.mxu0 0
  %229 = vmatpush1.bf16.msra.mxu0 %v189
  %230 = vmatprep.subr.bf16.mxu0 0
  %231 = vmatpush1.bf16.msra.mxu0 %v190
  %232 = vmatprep.subr.bf16.mxu0 0
  %233 = vmatpush1.bf16.msra.mxu0 %v191
  %234 = vmatprep.subr.bf16.mxu0 0
  %235 = vmatpush1.bf16.msra.mxu0 %v192
  %236 = vmatprep.subr.bf16.mxu0 0
  %237 = vmatpush1.bf16.msra.mxu0 %v193
  %238 = vmatprep.subr.bf16.mxu0 0
  %239 = vmatpush1.bf16.msra.mxu0 %v194
  %240 = vmatprep.subr.bf16.mxu0 0
  %241 = vmatpush1.bf16.msra.mxu0 %v195
  %242 = vmatprep.subr.bf16.mxu0 0
  %243 = vmatpush1.bf16.msra.mxu0 %v196
  %244 = vmatprep.subr.bf16.mxu0 0
  %245 = vmatpush1.bf16.msra.mxu0 %v197
  %246 = vmatprep.mubr.bf16.mxu0 %v103
  %247 = vmatmul.mubr.bf16.gmra.mrb[0].mxu0 %v102
  %v248 = vpop.f32.mrb[0].mxu0
  %v249 = vadd.f32 0.0, %v248
  %v250 = vpop.f32.mrb[0].mxu0
  %v251 = vpop.f32.mrb[0].mxu0
  %v252 = vadd.f32 0.0, %v251
  %v253 = vpop.f32.mrb[0].mxu0
  %254 = vmatprep.mubr.bf16.mxu0 %v105
  %255 = vmatmul.mubr.bf16.gmra.mrb[0].mxu0 %v104
  %v256 = vpop.f32.mrb[0].mxu0
  %v257 = vadd.f32 0.0, %v256
  %v258 = vpop.f32.mrb[0].mxu0
  %v259 = vpop.f32.mrb[0].mxu0
  %v260 = vadd.f32 0.0, %v259
  %v261 = vpop.f32.mrb[0].mxu0
  %262 = vmatprep.mubr.bf16.mxu0 %v107
  %263 = vmatmul.mubr.bf16.gmra.mrb[0].mxu0 %v106
  %v264 = vpop.f32.mrb[0].mxu0
  %v265 = vadd.f32 0.0, %v264
  %v266 = vpop.f32.mrb[0].mxu0
  %v267 = vpop.f32.mrb[0].mxu0
  %v268 = vadd.f32 0.0, %v267
  %v269 = vpop.f32.mrb[0].mxu0
  %270 = vmatprep.mubr.bf16.mxu0 %v109
  %271 = vmatmul.mubr.bf16.gmra.mrb[0].mxu0 %v108
  %v272 = vpop.f32.mrb[0].mxu0
  %v273 = vadd.f32 0.0, %v272
  %v274 = vpop.f32.mrb[0].mxu0
  %v275 = vpop.f32.mrb[0].mxu0
  %v276 = vadd.f32 0.0, %v275
  %v277 = vpop.f32.mrb[0].mxu0
  %278 = vdwg.mxu0
  %v279 = vadd.f32 %v62, %v249
  %v280 = vadd.f32 %v63, %v252
  %v281 = vadd.f32 %v64, %v257
  %v282 = vadd.f32 %v65, %v260
  %v283 = vadd.f32 %v66, %v265
  %v284 = vadd.f32 %v67, %v268
  %v285 = vadd.f32 %v68, %v273
  %v286 = vadd.f32 %v69, %v276
  %287 = vst [vmem:[#allocation2] sm:$0xff] %v279
  %288 = vst [vmem:[#allocation2 + $0x8] sm:$0xff] %v280
  %289 = vst [vmem:[#allocation2 + $0x10] sm:$0xff] %v281
  %290 = vst [vmem:[#allocation2 + $0x18] sm:$0xff] %v282
  %291 = vst [vmem:[#allocation2 + $0x20] sm:$0xff] %v283
  %292 = vst [vmem:[#allocation2 + $0x28] sm:$0xff] %v284
  %293 = vst [vmem:[#allocation2 + $0x30] sm:$0xff] %v285
  %294 = vst [vmem:[#allocation2 + $0x38] sm:$0xff] %v286
  // Predicated region
  $region22: #{_union_rgcn_call.1} parent=0 // pred_check
    %p295 = pneg %p18
  $region23: #{_union_rgcn_call.1} parent=0 // pred_check_branch
    %297 = sbr.rel (%p295) target = $region25
  $region24: #{_union_rgcn_call.1} parent=0 // pred_region
    %v298 = vld [vmem:[#allocation2] sm:$0xff]
    %v299 = vld [vmem:[#allocation2 + $0x8] sm:$0xff]
    %v300 = vld [vmem:[#allocation2 + $0x10] sm:$0xff]
    %v301 = vld [vmem:[#allocation2 + $0x18] sm:$0xff]
    %v302 = vld [vmem:[#allocation2 + $0x20] sm:$0xff]
    %v303 = vld [vmem:[#allocation2 + $0x28] sm:$0xff]
    %v304 = vld [vmem:[#allocation2 + $0x30] sm:$0xff]
    %v305 = vld [vmem:[#allocation2 + $0x38] sm:$0xff]
    %314 = vrot.lane.b32.xlu0 %v298, 96
    %v315 = vpop.permute.xlu0 %314
    %316 = vrot.lane.b32.xlu0 %v299, 96
    %v317 = vpop.permute.xlu0 %316
    %318 = vrot.lane.b32.xlu0 %v300, 96
    %v319 = vpop.permute.xlu0 %318
    %320 = vrot.lane.b32.xlu0 %v301, 96
    %v321 = vpop.permute.xlu0 %320
    %322 = vrot.lane.b32.xlu0 %v302, 96
    %v323 = vpop.permute.xlu0 %322
    %324 = vrot.lane.b32.xlu0 %v303, 96
    %v325 = vpop.permute.xlu0 %324
    %326 = vrot.lane.b32.xlu0 %v304, 96
    %v327 = vpop.permute.xlu0 %326
    %328 = vrot.lane.b32.xlu0 %v305, 96
    %v329 = vpop.permute.xlu0 %328
    %v338 = vadd.f32 %v298, %v315
    %v339 = vadd.f32 %v299, %v317
    %v340 = vadd.f32 %v300, %v319
    %v341 = vadd.f32 %v301, %v321
    %v342 = vadd.f32 %v302, %v323
    %v343 = vadd.f32 %v303, %v325
    %v344 = vadd.f32 %v304, %v327
    %v345 = vadd.f32 %v305, %v329
    %v346 = vld [vmem:[%s3] sm:$0x1]
    %v348 = vlaneseq
    %v349 = vshrl.u32 %v348, 7
    %v350 = vsub.s32 0, %v349
    %v351 = vrot.slane %v346, %v350
    %352 = vrot.lane.b32.xlu0 %v351, 96
    %v353 = vpop.permute.xlu0 %352
    %v355 = vadd.f32 %v298, %v353
    %v356 = vadd.f32 %v299, %v353
    %v357 = vadd.f32 %v300, %v353
    %v358 = vadd.f32 %v301, %v353
    %v359 = vadd.f32 %v302, %v353
    %v360 = vadd.f32 %v303, %v353
    %v361 = vadd.f32 %v304, %v353
    %v362 = vadd.f32 %v305, %v353
    %v363 = vxor.u32 %v355, 2147483648
    %v364 = vxor.u32 %v356, 2147483648
    %v365 = vxor.u32 %v357, 2147483648
    %v366 = vxor.u32 %v358, 2147483648
    %v367 = vxor.u32 %v359, 2147483648
    %v368 = vxor.u32 %v360, 2147483648
    %v369 = vxor.u32 %v361, 2147483648
    %v370 = vxor.u32 %v362, 2147483648
    %v371 = vmul.f32 %v363, 1.442695
    %v372 = vpow.pop %v371
    %v373 = vmul.f32 %v364, 1.442695
    %v374 = vpow.pop %v373
    %v375 = vmul.f32 %v365, 1.442695
    %v376 = vpow.pop %v375
    %v377 = vmul.f32 %v366, 1.442695
    %v378 = vpow.pop %v377
    %v379 = vmul.f32 %v367, 1.442695
    %v380 = vpow.pop %v379
    %v381 = vmul.f32 %v368, 1.442695
    %v382 = vpow.pop %v381
    %v383 = vmul.f32 %v369, 1.442695
    %v384 = vpow.pop %v383
    %v385 = vmul.f32 %v370, 1.442695
    %v386 = vpow.pop %v385
    %v387 = vadd.f32 %v372, 1.0
    %v388 = vadd.f32 %v374, 1.0
    %v389 = vadd.f32 %v376, 1.0
    %v390 = vadd.f32 %v378, 1.0
    %v391 = vadd.f32 %v380, 1.0
    %v392 = vadd.f32 %v382, 1.0
    %v393 = vadd.f32 %v384, 1.0
    %v394 = vadd.f32 %v386, 1.0
    %v395 = vrcp.pop %v387
    %v396 = vmul.f32 1.0, %v395
    %v397 = vrcp.pop %v388
    %v398 = vmul.f32 1.0, %v397
    %v399 = vrcp.pop %v389
    %v400 = vmul.f32 1.0, %v399
    %v401 = vrcp.pop %v390
    %v402 = vmul.f32 1.0, %v401
    %v403 = vrcp.pop %v391
    %v404 = vmul.f32 1.0, %v403
    %v405 = vrcp.pop %v392
    %v406 = vmul.f32 1.0, %v405
    %v407 = vrcp.pop %v393
    %v408 = vmul.f32 1.0, %v407
    %v409 = vrcp.pop %v394
    %v410 = vmul.f32 1.0, %v409
    %v411 = vld [vmem:[%s2] sm:$0xff]
    %v412 = vld [vmem:[%s2 + $0x8] sm:$0xff]
    %v413 = vld [vmem:[%s2 + $0x10] sm:$0xff]
    %v414 = vld [vmem:[%s2 + $0x18] sm:$0xff]
    %v415 = vld [vmem:[%s2 + $0x20] sm:$0xff]
    %v416 = vld [vmem:[%s2 + $0x28] sm:$0xff]
    %v417 = vld [vmem:[%s2 + $0x30] sm:$0xff]
    %v418 = vld [vmem:[%s2 + $0x38] sm:$0xff]
    %427 = vrot.lane.b32.xlu0 %v338, 96
    %v428 = vpop.permute.xlu0 %427
    %429 = vrot.lane.b32.xlu0 %v339, 96
    %v430 = vpop.permute.xlu0 %429
    %431 = vrot.lane.b32.xlu0 %v340, 96
    %v432 = vpop.permute.xlu0 %431
    %433 = vrot.lane.b32.xlu0 %v341, 96
    %v434 = vpop.permute.xlu0 %433
    %435 = vrot.lane.b32.xlu0 %v342, 96
    %v436 = vpop.permute.xlu0 %435
    %437 = vrot.lane.b32.xlu0 %v343, 96
    %v438 = vpop.permute.xlu0 %437
    %439 = vrot.lane.b32.xlu0 %v344, 96
    %v440 = vpop.permute.xlu0 %439
    %441 = vrot.lane.b32.xlu0 %v345, 96
    %v442 = vpop.permute.xlu0 %441
    %v451 = vadd.f32 %v298, %v428
    %v452 = vadd.f32 %v299, %v430
    %v453 = vadd.f32 %v300, %v432
    %v454 = vadd.f32 %v301, %v434
    %v455 = vadd.f32 %v302, %v436
    %v456 = vadd.f32 %v303, %v438
    %v457 = vadd.f32 %v304, %v440
    %v458 = vadd.f32 %v305, %v442
    %467 = vrot.lane.b32.xlu0 %v451, 96
    %v468 = vpop.permute.xlu0 %467
    %469 = vrot.lane.b32.xlu0 %v452, 96
    %v470 = vpop.permute.xlu0 %469
    %471 = vrot.lane.b32.xlu0 %v453, 96
    %v472 = vpop.permute.xlu0 %471
    %473 = vrot.lane.b32.xlu0 %v454, 96
    %v474 = vpop.permute.xlu0 %473
    %475 = vrot.lane.b32.xlu0 %v455, 96
    %v476 = vpop.permute.xlu0 %475
    %477 = vrot.lane.b32.xlu0 %v456, 96
    %v478 = vpop.permute.xlu0 %477
    %479 = vrot.lane.b32.xlu0 %v457, 96
    %v480 = vpop.permute.xlu0 %479
    %481 = vrot.lane.b32.xlu0 %v458, 96
    %v482 = vpop.permute.xlu0 %481
    %v491 = vmul.f32 %v396, %v468
    %v492 = vmul.f32 %v398, %v470
    %v493 = vmul.f32 %v400, %v472
    %v494 = vmul.f32 %v402, %v474
    %v495 = vmul.f32 %v404, %v476
    %v496 = vmul.f32 %v406, %v478
    %v497 = vmul.f32 %v408, %v480
    %v498 = vmul.f32 %v410, %v482
    %v499 = vsub.f32 1.0, %v396
    %v500 = vsub.f32 1.0, %v398
    %v501 = vsub.f32 1.0, %v400
    %v502 = vsub.f32 1.0, %v402
    %v503 = vsub.f32 1.0, %v404
    %v504 = vsub.f32 1.0, %v406
    %v505 = vsub.f32 1.0, %v408
    %v506 = vsub.f32 1.0, %v410
    %515 = vrot.lane.b32.xlu0 %v411, 96
    %v516 = vpop.permute.xlu0 %515
    %517 = vrot.lane.b32.xlu0 %v412, 96
    %v518 = vpop.permute.xlu0 %517
    %519 = vrot.lane.b32.xlu0 %v413, 96
    %v520 = vpop.permute.xlu0 %519
    %521 = vrot.lane.b32.xlu0 %v414, 96
    %v522 = vpop.permute.xlu0 %521
    %523 = vrot.lane.b32.xlu0 %v415, 96
    %v524 = vpop.permute.xlu0 %523
    %525 = vrot.lane.b32.xlu0 %v416, 96
    %v526 = vpop.permute.xlu0 %525
    %527 = vrot.lane.b32.xlu0 %v417, 96
    %v528 = vpop.permute.xlu0 %527
    %529 = vrot.lane.b32.xlu0 %v418, 96
    %v530 = vpop.permute.xlu0 %529
    %v539 = vmul.f32 %v499, %v516
    %v540 = vmul.f32 %v500, %v518
    %v541 = vmul.f32 %v501, %v520
    %v542 = vmul.f32 %v502, %v522
    %v543 = vmul.f32 %v503, %v524
    %v544 = vmul.f32 %v504, %v526
    %v545 = vmul.f32 %v505, %v528
    %v546 = vmul.f32 %v506, %v530
    %v547 = vadd.f32 %v491, %v539
    %v548 = vadd.f32 %v492, %v540
    %v549 = vadd.f32 %v493, %v541
    %v550 = vadd.f32 %v494, %v542
    %v551 = vadd.f32 %v495, %v543
    %v552 = vadd.f32 %v496, %v544
    %v553 = vadd.f32 %v497, %v545
    %v554 = vadd.f32 %v498, %v546
    %v555 = vmax.f32 %v547, 0.0
    %v556 = vmax.f32 %v548, 0.0
    %v557 = vmax.f32 %v549, 0.0
    %v558 = vmax.f32 %v550, 0.0
    %v559 = vmax.f32 %v551, 0.0
    %v560 = vmax.f32 %v552, 0.0
    %v561 = vmax.f32 %v553, 0.0
    %v562 = vmax.f32 %v554, 0.0
    %571 = vrot.lane.b32.xlu0 %v555, 32
    %v572 = vpop.permute.xlu0 %571
    %573 = vrot.lane.b32.xlu0 %v556, 32
    %v574 = vpop.permute.xlu0 %573
    %575 = vrot.lane.b32.xlu0 %v557, 32
    %v576 = vpop.permute.xlu0 %575
    %577 = vrot.lane.b32.xlu0 %v558, 32
    %v578 = vpop.permute.xlu0 %577
    %579 = vrot.lane.b32.xlu0 %v559, 32
    %v580 = vpop.permute.xlu0 %579
    %581 = vrot.lane.b32.xlu0 %v560, 32
    %v582 = vpop.permute.xlu0 %581
    %583 = vrot.lane.b32.xlu0 %v561, 32
    %v584 = vpop.permute.xlu0 %583
    %585 = vrot.lane.b32.xlu0 %v562, 32
    %v586 = vpop.permute.xlu0 %585
    %vm595 = vcmask 261120
    %v596 = vsel %vm595, %v572, 0.0
    %v597 = vsel %vm595, %v574, 0.0
    %v598 = vsel %vm595, %v576, 0.0
    %v599 = vsel %vm595, %v578, 0.0
    %v600 = vsel %vm595, %v580, 0.0
    %v601 = vsel %vm595, %v582, 0.0
    %v602 = vsel %vm595, %v584, 0.0
    %v603 = vsel %vm595, %v586, 0.0
    %604 = vst [vmem:[%s4] sm:$0xff] %v596
    %605 = vst [vmem:[%s4 + $0x8] sm:$0xff] %v597
    %606 = vst [vmem:[%s4 + $0x10] sm:$0xff] %v598
    %607 = vst [vmem:[%s4 + $0x18] sm:$0xff] %v599
    %608 = vst [vmem:[%s4 + $0x20] sm:$0xff] %v600
    %609 = vst [vmem:[%s4 + $0x28] sm:$0xff] %v601
    %610 = vst [vmem:[%s4 + $0x30] sm:$0xff] %v602
    %611 = vst [vmem:[%s4 + $0x38] sm:$0xff] %v603
  $region25: #{_union_rgcn_call.1} parent=0 // pred_fallthru
    _
  // Predicated region
  $region26: #{_union_rgcn_call.1} parent=0 // pred_check
    _
  $region27: #{_union_rgcn_call.1} parent=0 // pred_check_branch
    %613 = sbr.rel (0) target = $region29
  $region28: #{_union_rgcn_call.1} parent=0 // pred_region
    _
  $region29: #{_union_rgcn_call.1} parent=0 // pred_fallthru
    _
  // Predicated region
  $region30: #{_union_rgcn_call.1} parent=0 // pred_check
    _
  $region31: #{_union_rgcn_call.1} parent=0 // pred_check_branch
    %615 = sbr.rel (0) target = $region33
  $region32: #{_union_rgcn_call.1} parent=0 // pred_region
    _
  $region33: #{_union_rgcn_call.1} parent=0 // pred_fallthru
    _

</llo_original>
